<compile_context>
chip_gen: v7x
topology: tpu7x:2x2x1
jax: 0.10.0
libtpu: 0.0.40
codegen_flags: <defaults>
</compile_context>

<pallas_src>
import functools

import jax
import jax.numpy as jnp
from jax.experimental import pallas as pl
from jax.experimental.pallas import tpu as pltpu

# ---------------- small, TPU-friendly synthetic sizes ----------------
NUM_CLASSES = 8          # cfg.MODEL.NUM_CLASSES
HIDDEN = 16              # cfg.M3A.HIDDEN_LAYER
FEATURE = 32             # feature_size == channel dim C of the 3D feature map
N, T, H, W = 2, 4, 8, 8  # batch, temporal, spatial
S = T * H * W            # flattened spatio-temporal extent (256)
LEAKY_SLOPE = 0.2        # nn.LeakyReLU(0.2)


# ---------------------------- Pallas kernel ----------------------------
def _m3a_head_kernel(x_ref, w1_ref, w2_ref, o_ref, acc_ref,
                     *, n_groups, lane_w, inv_s):
    # x_ref  : (bn, C, s_blk)  streamed chunk of x (S on lanes)
    # w1_ref : (C, HIDDEN)     GraphConvolution-1 weight (VMEM-resident)
    # w2_ref : (HIDDEN, K)     GraphConvolution-2 weight scaled by dot(am, rs)
    # o_ref  : (bn, 1, K)      sigmoid(class logits), written once per batch block
    # acc_ref: (bn, C, lane_w) f32 lane-wise partial-sum accumulator (scratch)
    s_step = pl.program_id(1)

    @pl.when(s_step == 0)
    def _init():
        acc_ref[...] = jnp.zeros_like(acc_ref)

    # Steady state: pure VPU adds of 128-lane groups into the f32 accumulator.
    # (.astype keeps this correct if x is fed as bf16.)
    for g in range(n_groups):
        acc_ref[...] += x_ref[:, :, g * lane_w:(g + 1) * lane_w].astype(jnp.float32)

    @pl.when(s_step == pl.num_programs(1) - 1)
    def _epilogue():
        # AvgPool3d(full extent) + mean([2,3,4]) == global mean over S.
        pooled = jnp.sum(acc_ref[...], axis=-1) * inv_s                   # (bn, C)
        # GCN-1 right factor (all K node rows identical -> one row per sample).
        v = jnp.dot(pooled, w1_ref[...],
                    preferred_element_type=jnp.float32)                   # (bn, HID)
        # rowsum(adj) >= 0  =>  LeakyReLU commutes with the rank-1 graph factor.
        v = jnp.where(v >= 0, v, LEAKY_SLOPE * v)                         # LeakyReLU(0.2)
        # node-mean + GCN-2: adj.mean(0)·rowsum(adj) already folded into W2.
        logits = jnp.dot(v, w2_ref[...],
                         preferred_element_type=jnp.float32)              # (bn, K)
        o_ref[...] = jax.nn.sigmoid(logits)[:, None, :]                   # eval head act


def _pick_block(total, align, max_elems):
    """Largest divisor of `total` that is a multiple of `align` and <= max_elems.
    Falls back to the full extent (always legal as a BlockSpec)."""
    if total % align != 0:
        return total
    best = None
    b = align
    while b <= total:
        if total % b == 0 and b <= max_elems:
            best = b
        b += align
    return best if best is not None else total


def prepare_m3a_params(adj_in, w1, w2):
    """One-time parameter preprocessing (the PyTorch __init__ buffer step)."""
    rowsum = jnp.sum(adj_in, axis=1)          # (K,)
    adj_mean = jnp.mean(adj_in, axis=0)       # (K,)
    # The factorization LeakyReLU(v*rs) == rs*LeakyReLU(v) requires rs >= 0;
    # always true for the normalized non-negative adjacency of this module.
    if not bool(jnp.all(rowsum >= 0)):
        # TODO(synk): generic-adjacency fallback (pass rowsum/adj_mean into the
        # kernel and run the exact K-node epilogue) for file-loaded adjacencies
        # with negative row sums.
        raise NotImplementedError("adjacency row sums must be non-negative")
    c_scalar = jnp.dot(rowsum, adj_mean)      # scalar: adj.mean(0) . rowsum(adj)
    return w1.astype(jnp.float32), (c_scalar * w2).astype(jnp.float32)


def m3a_head_forward(x_ncdhw, w1, w2_eff, *, block_n=None, block_s=None):
    """x_ncdhw: (N, C, T, H, W) -> (N, NUM_CLASSES) float32."""
    n, c, t, h, w = x_ncdhw.shape
    s = t * h * w
    # Free reshape (no transpose / HBM relayout): channels stay in place, the
    # flattened spatio-temporal axis S maps onto TPU lanes inside the kernel.
    x_ncs = x_ncdhw.reshape(n, c, s)
    hid = w1.shape[1]
    k = w2_eff.shape[1]
    itemsize = x_ncs.dtype.itemsize

    # Batch block: keep >= 2 blocks along N when possible so the "parallel"
    # grid axis can shard across v7x's two TensorCores.
    if block_n is None:
        block_n = 1 if n > 1 else n
    # S block: multiple of 128 dividing S, per-buffer x block <= ~8 MiB
    # (2x for double-buffering stays well inside v7x's 64 MiB VMEM).
    if block_s is None:
        max_lanes = max(128, (8 << 20) // max(1, block_n * c * itemsize))
        block_s = _pick_block(s, 128, max_lanes)
    if block_s % 128 == 0:
        lane_w, n_groups = 128, block_s // 128
    else:  # ragged S: single full-extent chunk
        lane_w, n_groups = block_s, 1

    grid = (n // block_n, s // block_s)

    kernel = functools.partial(_m3a_head_kernel,
                               n_groups=n_groups, lane_w=lane_w, inv_s=1.0 / s)

    # VMEM budget: 2x double-buffered x block + resident params + scratch + out.
    x_block_bytes = block_n * c * block_s * itemsize
    misc_bytes = (2 * (c * hid + hid * k) + block_n * c * lane_w + 2 * block_n * k) * 4
    vmem_limit = int(min(64 << 20, max(4 << 20, 2 * x_block_bytes + misc_bytes + (2 << 20))))

    cost = pl.CostEstimate(
        flops=int(n * c * s + 2 * n * c * hid + 2 * n * hid * k),
        transcendentals=int(n * k),
        bytes_accessed=int(n * c * s * itemsize + (c * hid + hid * k) * 4 + n * k * 4),
    )

    out = pl.pallas_call(
        kernel,
        out_shape=jax.ShapeDtypeStruct((n, 1, k), jnp.float32),
        grid_spec=pltpu.PrefetchScalarGridSpec(
            num_scalar_prefetch=0,
            grid=grid,
            in_specs=[
                # streamed x chunk: (bn, C, s_blk), S-chunk axis is the grid's
                # inner ("arbitrary") axis so the accumulator pattern is valid.
                pl.BlockSpec((block_n, c, block_s), lambda i, j: (i, 0, j)),
                # tiny params: constant index_maps -> fetched once, VMEM-resident.
                pl.BlockSpec((c, hid), lambda i, j: (0, 0)),
                pl.BlockSpec((hid, k), lambda i, j: (0, 0)),
            ],
            out_specs=pl.BlockSpec((block_n, 1, k), lambda i, j: (i, 0, 0)),
            scratch_shapes=[pltpu.VMEM((block_n, c, lane_w), jnp.float32)],
        ),
        compiler_params=pltpu.CompilerParams(
            dimension_semantics=("parallel", "arbitrary"),
            vmem_limit_bytes=vmem_limit,
        ),
        cost_estimate=cost,
    )(x_ncs, w1, w2_eff)
    return out.reshape(n, k)


# ------------------- deterministic parameter synthesis -------------------
def make_graph_adj(key, num_classes, t=0.4):
    # get_graph_adj_matrix on a synthetic co-occurrence matrix (no .pkl file)
    raw = jax.random.uniform(key, (num_classes, num_classes), dtype=jnp.float32)
    a = jnp.where(raw < t, 0.0, 1.0)
    a = a * 0.25 / (a.sum(0, keepdims=True) + 1e-6)
    a = a + jnp.eye(num_classes, dtype=jnp.float32)
    # get_graph_adj_input
    d = jnp.power(a.sum(1), -0.5)
    dmat = jnp.diag(d)
    return jnp.matmul(jnp.matmul(a, dmat).T, dmat)


def make_gcn_weight(key, fan_in, fan_out):
    # GraphConvolution.reset_parameters: uniform(-1/sqrt(out), 1/sqrt(out))
    stdv = 1.0 / jnp.sqrt(jnp.float32(fan_out))
    return jax.random.uniform(
        key, (fan_in, fan_out), dtype=jnp.float32, minval=-stdv, maxval=stdv)


# --------------------- reference (full uncollapsed math) ---------------------
def m3a_head_reference(x_ncdhw, adj_in, w1, w2):
    n, c = x_ncdhw.shape[0], x_ncdhw.shape[1]
    pooled = jnp.mean(x_ncdhw, axis=(2, 3, 4))                          # (N, C)
    x_rgb = jnp.broadcast_to(pooled[:, None, :], (n, NUM_CLASSES, c))   # (N, K, C)
    h = jnp.einsum('nkc,ch->nkh', x_rgb, w1)          # GCN-1: x @ W1
    h = jnp.einsum('kj,njh->nkh', adj_in, h)          # GCN-1: adj @ (.)
    h = jnp.where(h >= 0, h, LEAKY_SLOPE * h)         # LeakyReLU(0.2)
    h = jnp.einsum('nkh,ho->nko', h, w2)              # GCN-2: h @ W2
    h = jnp.einsum('kj,njo->nko', adj_in, h)          # GCN-2: adj @ (.)
    return jax.nn.sigmoid(jnp.mean(h, axis=1))        # node-mean + sigmoid


if __name__ == "__main__":
    key = jax.random.PRNGKey(0)
    kx, kadj, kw1, kw2 = jax.random.split(key, 4)

    # deterministic example input in the PyTorch NCDHW layout
    x = jax.random.normal(kx, (N, FEATURE, T, H, W), dtype=jnp.float32)

    adj_in = make_graph_adj(kadj, NUM_CLASSES)
    w1 = make_gcn_weight(kw1, FEATURE, HIDDEN)
    w2 = make_gcn_weight(kw2, HIDDEN, NUM_CLASSES)

    # One-time __init__-style preprocessing (adjacency folded into W2).
    w1_p, w2_eff = prepare_m3a_params(adj_in, w1, w2)

    # block_s=128 forces grid=(2, 2): exercises accumulator init / multi-chunk
    # accumulation / epilogue and the parallel batch axis at toy sizes.
    out = jax.block_until_ready(m3a_head_forward(x, w1_p, w2_eff, block_s=128))
    ref = jax.block_until_ready(m3a_head_reference(x, adj_in, w1, w2))

    assert out.shape == (N, NUM_CLASSES)
    assert jnp.allclose(out, ref, atol=1e-5, rtol=1e-5), \
        f"max abs err = {jnp.max(jnp.abs(out - ref))}"

    # TODO(synk): AUDIO/TEXT/AUDIOTEXT modal branches, the CROSS-fusion
    # transformer decoder path, and training-mode dropout are not covered by
    # this config (they require pickled lexicons / undefined helper modules).
    print("KERNEL_OK")
</pallas_src>

<mosaic_0001>
module attributes {stable_mosaic.version = 11 : i64} {
  func.func @_m3a_head_kernel(%arg0: i32, %arg1: i32, %arg2: memref<1x32x128xf32, #tpu.memory_space<vmem>>, %arg3: memref<32x16xf32, #tpu.memory_space<vmem>>, %arg4: memref<16x8xf32, #tpu.memory_space<vmem>>, %arg5: memref<1x1x8xf32, #tpu.memory_space<vmem>>, %arg6: memref<1x32x128xf32, #tpu.memory_space<vmem>>) attributes {dimension_semantics = [#tpu.dimension_semantics<parallel>, #tpu.dimension_semantics<arbitrary>], iteration_bounds = array<i64: 2, 2>, scalar_prefetch = 0 : i64, scratch_operands = 1 : i64, tpu.core_type = #tpu.core_type<tc>, window_params = [{transform_indices = @transform_0, window_bounds = array<i64: 1, 32, 128>}, {pipeline_mode = #tpu.pipeline_mode<synchronous>, transform_indices = @transform_1, window_bounds = array<i64: 32, 16>}, {pipeline_mode = #tpu.pipeline_mode<synchronous>, transform_indices = @transform_2, window_bounds = array<i64: 16, 8>}, {transform_indices = @transform_3, window_bounds = array<i64: 1, 1, 8>}]} {
    %c0_i32 = arith.constant 0 : i32
    %0 = arith.cmpi eq, %arg1, %c0_i32 : i32
    %1 = arith.extui %0 : i1 to i32
    %c0_i32_0 = arith.constant 0 : i32
    %2 = arith.cmpi ne, %1, %c0_i32_0 : i32
    scf.if %2 {
      %cst = arith.constant 0.000000e+00 : f32
      %10 = vector.broadcast %cst : f32 to vector<1x32x128xf32>
      %c0_10 = arith.constant 0 : index
      %c0_11 = arith.constant 0 : index
      %c0_12 = arith.constant 0 : index
      %11 = vector.load %arg6[%c0_10, %c0_11, %c0_12] : memref<1x32x128xf32, #tpu.memory_space<vmem>>, vector<1x32x128xf32>
      tpu.vector_store %arg6[%c0_10, %c0_11, %c0_12], %10 {strides = array<i32>} : memref<1x32x128xf32, #tpu.memory_space<vmem>>, vector<1x32x128xf32>,
    } else {
    }
    %c0 = arith.constant 0 : index
    %c0_1 = arith.constant 0 : index
    %c0_2 = arith.constant 0 : index
    %3 = vector.load %arg6[%c0, %c0_1, %c0_2] : memref<1x32x128xf32, #tpu.memory_space<vmem>>, vector<1x32x128xf32>
    %c0_3 = arith.constant 0 : index
    %c0_4 = arith.constant 0 : index
    %c0_5 = arith.constant 0 : index
    %4 = vector.load %arg2[%c0_3, %c0_4, %c0_5] : memref<1x32x128xf32, #tpu.memory_space<vmem>>, vector<1x32x128xf32>
    %5 = arith.addf %3, %4 : vector<1x32x128xf32>
    %c0_6 = arith.constant 0 : index
    %c0_7 = arith.constant 0 : index
    %c0_8 = arith.constant 0 : index
    %6 = vector.load %arg6[%c0_6, %c0_7, %c0_8] : memref<1x32x128xf32, #tpu.memory_space<vmem>>, vector<1x32x128xf32>
    tpu.vector_store %arg6[%c0_6, %c0_7, %c0_8], %5 {strides = array<i32>} : memref<1x32x128xf32, #tpu.memory_space<vmem>>, vector<1x32x128xf32>,
    %c1_i32 = arith.constant 1 : i32
    %7 = arith.cmpi eq, %arg1, %c1_i32 : i32
    %8 = arith.extui %7 : i1 to i32
    %c0_i32_9 = arith.constant 0 : i32
    %9 = arith.cmpi ne, %8, %c0_i32_9 : i32
    scf.if %9 {
      %c0_10 = arith.constant 0 : index
      %c0_11 = arith.constant 0 : index
      %c0_12 = arith.constant 0 : index
      %10 = vector.load %arg6[%c0_10, %c0_11, %c0_12] : memref<1x32x128xf32, #tpu.memory_space<vmem>>, vector<1x32x128xf32>
      %cst = arith.constant dense<0.000000e+00> : vector<1x32xf32>
      %11 = vector.multi_reduction <add>, %10, %cst [2] : vector<1x32x128xf32> to vector<1x32xf32>
      %cst_13 = arith.constant 3.906250e-03 : f32
      %12 = vector.broadcast %cst_13 : f32 to vector<1x32xf32>
      %13 = arith.mulf %11, %12 : vector<1x32xf32>
      %c0_14 = arith.constant 0 : index
      %c0_15 = arith.constant 0 : index
      %14 = vector.load %arg3[%c0_14, %c0_15] : memref<32x16xf32, #tpu.memory_space<vmem>>, vector<32x16xf32>
      %cst_16 = arith.constant dense<0.000000e+00> : vector<1x16xf32>
      %15 = tpu.matmul %13, %14, %cst_16 {dimension_numbers = #tpu.dot_dimension_numbers<[1], [0], [0], [1], [0, 0, 1, 1], [], []>} : vector<1x32xf32>, vector<32x16xf32>, vector<1x16xf32> -> vector<1x16xf32>
      %cst_17 = arith.constant 0.000000e+00 : f32
      %16 = vector.broadcast %cst_17 : f32 to vector<1x16xf32>
      %17 = arith.cmpf oge, %15, %16 : vector<1x16xf32>
      %cst_18 = arith.constant 2.000000e-01 : f32
      %18 = vector.broadcast %cst_18 : f32 to vector<1x16xf32>
      %19 = arith.mulf %18, %15 : vector<1x16xf32>
      %20 = arith.select %17, %15, %19 : vector<1x16xi1>, vector<1x16xf32>
      %c0_19 = arith.constant 0 : index
      %c0_20 = arith.constant 0 : index
      %21 = vector.load %arg4[%c0_19, %c0_20] : memref<16x8xf32, #tpu.memory_space<vmem>>, vector<16x8xf32>
      %cst_21 = arith.constant dense<0.000000e+00> : vector<1x8xf32>
      %22 = tpu.matmul %20, %21, %cst_21 {dimension_numbers = #tpu.dot_dimension_numbers<[1], [0], [0], [1], [0, 0, 1, 1], [], []>} : vector<1x16xf32>, vector<16x8xf32>, vector<1x8xf32> -> vector<1x8xf32>
      %23 = arith.negf %22 : vector<1x8xf32>
      %24 = math.exp %23 : vector<1x8xf32>
      %cst_22 = arith.constant 1.000000e+00 : f32
      %25 = vector.broadcast %cst_22 : f32 to vector<1x8xf32>
      %26 = arith.addf %25, %24 : vector<1x8xf32>
      %27 = arith.divf %25, %26 : vector<1x8xf32>
      %28 = vector.shape_cast %27 : vector<1x8xf32> to vector<1x1x8xf32>
      %c0_23 = arith.constant 0 : index
      %c0_24 = arith.constant 0 : index
      %c0_25 = arith.constant 0 : index
      %29 = vector.load %arg5[%c0_23, %c0_24, %c0_25] : memref<1x1x8xf32, #tpu.memory_space<vmem>>, vector<1x1x8xf32>
      tpu.vector_store %arg5[%c0_23, %c0_24, %c0_25], %28 {strides = array<i32>} : memref<1x1x8xf32, #tpu.memory_space<vmem>>, vector<1x1x8xf32>,
    } else {
    }
    return
  }
  func.func @transform_0(%arg0: i32, %arg1: i32) -> (i32, i32, i32) {
    %c0_i32 = arith.constant 0 : i32
    %c0_i32_0 = arith.constant 0 : i32
    return %arg0, %c0_i32, %arg1 : i32, i32, i32
  }
  func.func @transform_1(%arg0: i32, %arg1: i32) -> (i32, i32) {
    %c0_i32 = arith.constant 0 : i32
    %c0_i32_0 = arith.constant 0 : i32
    %c0_i32_1 = arith.constant 0 : i32
    return %c0_i32, %c0_i32_0 : i32, i32
  }
  func.func @transform_2(%arg0: i32, %arg1: i32) -> (i32, i32) {
    %c0_i32 = arith.constant 0 : i32
    %c0_i32_0 = arith.constant 0 : i32
    %c0_i32_1 = arith.constant 0 : i32
    return %c0_i32, %c0_i32_0 : i32, i32
  }
  func.func @transform_3(%arg0: i32, %arg1: i32) -> (i32, i32, i32) {
    %c0_i32 = arith.constant 0 : i32
    %c0_i32_0 = arith.constant 0 : i32
    %c0_i32_1 = arith.constant 0 : i32
    return %arg0, %c0_i32, %c0_i32_0 : i32, i32, i32
  }
}

</mosaic_0001>

<llo_original>
// kernel: tpu_custom_call.1
$region0: #{tpu_custom_call.1}
  #allocation0 [shape = 'u32[]', space=smem, size = 0x4, offset = 0x4, fixed_abs, tag = 'smem constant byte address 0x4 - core index']
  #allocation1 [shape = 'u32[144,128]{1,0:T(1,128)}', space=vmem, size = 0x12000, scoped, tag = 'internal scratch']
  #allocation2 [shape = 'f32[1,32,128]{2,1,0:T(8,128)}', space=vmem, size = 0x4000, scoped, tag = 'scratch operand']
  %s0 = inlined_call_operand.hbm [shape: f32[2,32,256], index: 0, kind: input, shape index: {}]
  %s1 = inlined_call_operand.vmem [shape: f32[32,16], index: 1, kind: input, shape index: {}]
  %s2 = inlined_call_operand.vmem [shape: f32[16,8], index: 2, kind: input, shape index: {}]
  %s3 = inlined_call_operand.hbm [shape: f32[2,1,8], index: 3, kind: output, shape index: {}]
  %s4 = sld [smem:[#allocation0]]
  $region57: #{tpu_custom_call.1} parent=0
    _
  %s6 = ssub.s32 1, %s4
  %s7 = scalar_select 0, %s6, %s4
  $region1: #{tpu_custom_call.1} parent=0
    #allocation3 [shape = 'u8[32768]{0}', space=vmem, size = 0x8000, scoped, tag = 'input window, operand 0']
    #allocation4 [shape = 's32[2]{0}', space=sflag, size = 0x8, scoped, tag = 'scoped memory for tpu_custom_call.1']
    #allocation5 [shape = 's32[2]{0}', space=sflag, size = 0x8, scoped, tag = 'scoped memory for tpu_custom_call.1']
    #allocation6 [shape = 'u8[1024]{0}', space=vmem, size = 0x400, scoped, tag = 'output window, operand 0']
    %8 = vsyncpa [#allocation4], 0
    %s9 = scalar_lea.sflag [#allocation4], 1
    %10 = vsyncpa %s9, 0
    %11 = vsyncpa [#allocation5], 0
    %s12 = scalar_lea.sflag [#allocation5], 1
    %13 = vsyncpa %s12, 0
    loop: start=0, step=1, limit=6
    $region2: #{tpu_custom_call.1} parent=1 // loop_pre_header
      _
    $region3: #{tpu_custom_call.1} parent=1 // loop_header
      %s15 = sphi 0, %s19
      %p16 = scmp.ge.s32.totalorder %s15, 6
      %s22 = sphi 0, %s34
      %s23 = sphi 0, %s30
      %s24 = sphi 0, %s22
      %s25 = sphi 0, %s23
      %s26 = sphi 0, %s24
      %s27 = sphi 0, %s25
      %s39 = sphi 0, %s41
      %s42 = sphi 0, %s39
      %s43 = sphi 0, %s42
      %s59 = sphi 0, %s43
      %s63 = sphi 0, %s63
      %s65 = sphi 0, %s63
      %s66 = sphi 0, %s65
      %s80 = sphi 0, %s66
      %s84 = sphi 0, %s84
      %s86 = sphi 0, %s84
      %s87 = sphi 0, %s86
      %s101 = sphi 0, %s87
      %s107 = sphi 0, %s109
      %s110 = sphi 0, %s107
      %s111 = sphi 0, %s110
      %s127 = sphi 0, %s111
    $region4: #{tpu_custom_call.1} parent=1 // loop_header_branch
      %18 = sbr.rel (%p16) target = $region8
    $region5: #{tpu_custom_call.1} parent=1 // loop_body
      %s20 = ssub.s32 %s15, 1
      %s21 = ssub.s32 %s15, 2
      %s28 = sadd.s32 1, %s23
      %p29 = scmp.ge.s32.totalorder %s28, 2
      %s30 = scalar_select %p29, 0, %s28
      %s31 = sadd.s32 1, %s22
      %s32 = scalar_select %p29, %s31, %s22
      %p33 = scmp.ge.s32.totalorder %s32, 2
      %s34 = scalar_select %p33, 0, %s32
      %s35 = ssub.s32 %s22, %s34
      %s36 = ssub.s32 %s23, %s30
      %s37 = sor.u32 %s35, %s36
      %p38 = scmp.eq.s32.totalorder %s37, 0
      %s40 = sadd.s32 %s39, 1
      %s41 = scalar_select %p38, %s39, %s40
      %p44 = pneg %p38
      %p45 = scmp.eq.s32.totalorder %s15, 3
      %p46 = por %p44, %p45
      %p47 = scmp.ne.s32.totalorder %s39, %s42
      %p48 = scmp.eq.s32.totalorder %s15, 0
      %p49 = por %p47, %p48
      %p50 = scmp.ne.s32.totalorder %s39, %s42
      %p51 = scmp.eq.s32.totalorder %s20, 3
      %p52 = por %p50, %p51
      %p53 = scmp.ne.s32.totalorder %s42, %s43
      %p54 = scmp.eq.s32.totalorder %s20, 0
      %p55 = por %p53, %p54
      %p56 = scmp.ne.s32.totalorder %s42, %s43
      %p57 = scmp.eq.s32.totalorder %s21, 3
      %p58 = por %p56, %p57
      %p60 = scmp.ne.s32.totalorder %s43, %s59
      %p61 = scmp.eq.s32.totalorder %s21, 0
      %p62 = por %p60, %p61
      %s64 = sadd.s32 %s63, 1
      %p67 = scmp.eq.s32.totalorder %s15, 3
      %p68 = scmp.ne.s32.totalorder %s63, %s65
      %p69 = scmp.eq.s32.totalorder %s15, 0
      %p70 = por %p68, %p69
      %p71 = scmp.ne.s32.totalorder %s63, %s65
      %p72 = scmp.eq.s32.totalorder %s20, 3
      %p73 = por %p71, %p72
      %p74 = scmp.ne.s32.totalorder %s65, %s66
      %p75 = scmp.eq.s32.totalorder %s20, 0
      %p76 = por %p74, %p75
      %p77 = scmp.ne.s32.totalorder %s65, %s66
      %p78 = scmp.eq.s32.totalorder %s21, 3
      %p79 = por %p77, %p78
      %p81 = scmp.ne.s32.totalorder %s66, %s80
      %p82 = scmp.eq.s32.totalorder %s21, 0
      %p83 = por %p81, %p82
      %s85 = sadd.s32 %s84, 1
      %p88 = scmp.eq.s32.totalorder %s15, 3
      %p89 = scmp.ne.s32.totalorder %s84, %s86
      %p90 = scmp.eq.s32.totalorder %s15, 0
      %p91 = por %p89, %p90
      %p92 = scmp.ne.s32.totalorder %s84, %s86
      %p93 = scmp.eq.s32.totalorder %s20, 3
      %p94 = por %p92, %p93
      %p95 = scmp.ne.s32.totalorder %s86, %s87
      %p96 = scmp.eq.s32.totalorder %s20, 0
      %p97 = por %p95, %p96
      %p98 = scmp.ne.s32.totalorder %s86, %s87
      %p99 = scmp.eq.s32.totalorder %s21, 3
      %p100 = por %p98, %p99
      %p102 = scmp.ne.s32.totalorder %s87, %s101
      %p103 = scmp.eq.s32.totalorder %s21, 0
      %p104 = por %p102, %p103
      %s105 = ssub.s32 %s22, %s34
      %p106 = scmp.eq.s32.totalorder %s105, 0
      %s108 = sadd.s32 %s107, 1
      %s109 = scalar_select %p106, %s107, %s108
      %p112 = pneg %p106
      %p113 = scmp.eq.s32.totalorder %s15, 3
      %p114 = por %p112, %p113
      %p115 = scmp.ne.s32.totalorder %s107, %s110
      %p116 = scmp.eq.s32.totalorder %s15, 0
      %p117 = por %p115, %p116
      %p118 = scmp.ne.s32.totalorder %s107, %s110
      %p119 = scmp.eq.s32.totalorder %s20, 3
      %p120 = por %p118, %p119
      %p121 = scmp.ne.s32.totalorder %s110, %s111
      %p122 = scmp.eq.s32.totalorder %s20, 0
      %p123 = por %p121, %p122
      %p124 = scmp.ne.s32.totalorder %s110, %s111
      %p125 = scmp.eq.s32.totalorder %s21, 3
      %p126 = por %p124, %p125
      %p128 = scmp.ne.s32.totalorder %s111, %s127
      %p129 = scmp.eq.s32.totalorder %s21, 0
      %p130 = por %p128, %p129
      %p131 = scmp.le.s32.totalorder 1, %s15
      %p132 = scmp.lt.s32.totalorder %s15, 5
      %p133 = pnand %p131, %p132
      %p134 = pneg %p133
      // Predicated region
      $region9: #{tpu_custom_call.1} parent=5 // pred_check
        _
      $region10: #{tpu_custom_call.1} parent=5 // pred_check_branch
        %136 = sbr.rel (%p133) target = $region12
      $region11: #{tpu_custom_call.1} parent=5 // pred_region
        %s137 = ssub.s32 %s15, 1
        // Predicated region
        $region13: #{tpu_custom_call.1} parent=11 // pred_check
          %p138 = pneg %p76
        $region14: #{tpu_custom_call.1} parent=11 // pred_check_branch
          %140 = sbr.rel (%p138) target = $region16
        $region15: #{tpu_custom_call.1} parent=11 // pred_region
          _
        $region16: #{tpu_custom_call.1} parent=11 // pred_fallthru
          _
        // Predicated region
        $region17: #{tpu_custom_call.1} parent=11 // pred_check
          %p141 = pneg %p97
        $region18: #{tpu_custom_call.1} parent=11 // pred_check_branch
          %143 = sbr.rel (%p141) target = $region20
        $region19: #{tpu_custom_call.1} parent=11 // pred_region
          _
        $region20: #{tpu_custom_call.1} parent=11 // pred_fallthru
          _
      $region12: #{tpu_custom_call.1} parent=5 // pred_fallthru
        _
      %p144 = scmp.lt.s32.totalorder %s15, 4
      // Predicated region
      $region21: #{tpu_custom_call.1} parent=5 // pred_check
        %p145 = pneg %p144
      $region22: #{tpu_custom_call.1} parent=5 // pred_check_branch
        %147 = sbr.rel (%p145) target = $region24
      $region23: #{tpu_custom_call.1} parent=5 // pred_region
        // Predicated region
        $region25: #{tpu_custom_call.1} parent=23 // pred_check
          %p148 = pneg %p49
        $region26: #{tpu_custom_call.1} parent=23 // pred_check_branch
          %150 = sbr.rel (%p148) target = $region28
        $region27: #{tpu_custom_call.1} parent=23 // pred_region
          %s151 = sand.u32 %s39, 1
          %s152 = scalar_lea.sflag [#allocation4], %s151
          %s153 = sand.u32 %s39, 1
          %s154 = smul.addr %s153, 32
          %s155 = scalar_lea.vmem [#allocation3], %s154
          %s157 = ssub.s32 512, 512
          %158 = vsyncadd %s152, %s157
          %s159 = smul.addr %s22, 8
          %s160 = sadd.s32 %s23, %s159
          %s161 = smul.addr %s160, 128
          %s162 = scalar_lea.hbm %s0, %s161
          %s163 = sshll.u32 %s155, 4
          %s164 = int_to_ptr.vmem [resolvable:$true] %s163
          %169 = dma.hbm_to_vmem [thread:$0]  %s162, 512, %s164, %s152, 256, 128, 8
        $region28: #{tpu_custom_call.1} parent=23 // pred_fallthru
          _
      $region24: #{tpu_custom_call.1} parent=5 // pred_fallthru
        _
      %p170 = scmp.le.s32.totalorder 1, %s15
      %p171 = scmp.lt.s32.totalorder %s15, 5
      %p172 = pnand %p170, %p171
      %p173 = pneg %p172
      // Predicated region
      $region29: #{tpu_custom_call.1} parent=5 // pred_check
        _
      $region30: #{tpu_custom_call.1} parent=5 // pred_check_branch
        %175 = sbr.rel (%p172) target = $region32
      $region31: #{tpu_custom_call.1} parent=5 // pred_region
        %s176 = ssub.s32 %s15, 1
        %s177 = sand.u32 %s42, 1
        %s178 = scalar_lea.sflag [#allocation4], %s177
        %s179 = sand.u32 %s42, 1
        %s180 = smul.addr %s179, 32
        %s181 = scalar_lea.vmem [#allocation3], %s180
        // Predicated region
        $region33: #{tpu_custom_call.1} parent=31 // pred_check
          %p182 = pneg %p55
        $region34: #{tpu_custom_call.1} parent=31 // pred_check_branch
          %184 = sbr.rel (%p182) target = $region36
        $region35: #{tpu_custom_call.1} parent=31 // pred_region
          %185 = dma.done %s178, 512
        $region36: #{tpu_custom_call.1} parent=31 // pred_fallthru
          _
        %s186 = sand.u32 %s42, 1
        %s187 = scalar_lea.sflag [#allocation4], %s186
        %s188 = sand.u32 %s42, 1
        %s189 = smul.addr %s188, 32
        %s190 = scalar_lea.vmem [#allocation3], %s189
        %p191 = pneg %p55
        %p192 = pneg %p52
        %p193 = pneg %p76
        %p194 = pneg %p73
        %p195 = pneg %p97
        %p196 = pneg %p94
        %p197 = pneg %p123
        %p198 = pneg %p120
        %s199 = sand.u32 %s110, 1
        %s200 = scalar_lea.sflag [#allocation5], %s199
        %s201 = sand.u32 %s110, 1
        %s202 = scalar_lea.vmem [#allocation6], %s201
        %p203 = scmp.eq.s32.totalorder %s25, 0
        // Predicated region
        $region37: #{tpu_custom_call.1} parent=31 // pred_check
          %p204 = pneg %p203
        $region38: #{tpu_custom_call.1} parent=31 // pred_check_branch
          %206 = sbr.rel (%p204) target = $region40
        $region39: #{tpu_custom_call.1} parent=31 // pred_region
          %207 = vst [vmem:[#allocation2] sm:$0xff] 0.0
          %208 = vst [vmem:[#allocation2 + $0x8] sm:$0xff] 0.0
          %209 = vst [vmem:[#allocation2 + $0x10] sm:$0xff] 0.0
          %210 = vst [vmem:[#allocation2 + $0x18] sm:$0xff] 0.0
        $region40: #{tpu_custom_call.1} parent=31 // pred_fallthru
          _
        %v211 = vld [vmem:[#allocation2] sm:$0xff]
        %v212 = vld [vmem:[#allocation2 + $0x8] sm:$0xff]
        %v213 = vld [vmem:[#allocation2 + $0x10] sm:$0xff]
        %v214 = vld [vmem:[#allocation2 + $0x18] sm:$0xff]
        %v215 = vld [vmem:[%s181] sm:$0xff]
        %v216 = vld [vmem:[%s181 + $0x8] sm:$0xff]
        %v217 = vld [vmem:[%s181 + $0x10] sm:$0xff]
        %v218 = vld [vmem:[%s181 + $0x18] sm:$0xff]
        %v219 = vadd.f32 %v211, %v215
        %v220 = vadd.f32 %v212, %v216
        %v221 = vadd.f32 %v213, %v217
        %v222 = vadd.f32 %v214, %v218
        %223 = vst [vmem:[#allocation2] sm:$0xff] %v219
        %224 = vst [vmem:[#allocation2 + $0x8] sm:$0xff] %v220
        %225 = vst [vmem:[#allocation2 + $0x10] sm:$0xff] %v221
        %226 = vst [vmem:[#allocation2 + $0x18] sm:$0xff] %v222
        %p227 = scmp.eq.s32.totalorder %s25, 1
        // Predicated region
        $region41: #{tpu_custom_call.1} parent=31 // pred_check
          %p228 = pneg %p227
        $region42: #{tpu_custom_call.1} parent=31 // pred_check_branch
          %230 = sbr.rel (%p228) target = $region44
        $region43: #{tpu_custom_call.1} parent=31 // pred_region
          %v231 = vld [vmem:[#allocation2] sm:$0xff]
          %v232 = vld [vmem:[#allocation2 + $0x8] sm:$0xff]
          %v233 = vld [vmem:[#allocation2 + $0x10] sm:$0xff]
          %v234 = vld [vmem:[#allocation2 + $0x18] sm:$0xff]
          %235 = vadd.xlane.f32.xlu0 %v231
          %v236 = vpop.xlane.xlu0 %235
          %237 = vadd.xlane.f32.xlu0 %v232
          %v238 = vpop.xlane.xlu0 %237
          %239 = vadd.xlane.f32.xlu0 %v233
          %v240 = vpop.xlane.xlu0 %239
          %241 = vadd.xlane.f32.xlu0 %v234
          %v242 = vpop.xlane.xlu0 %241
          %v243 = vmul.f32 %v236, 0.00390625
          %v244 = vmul.f32 %v238, 0.00390625
          %v245 = vmul.f32 %v240, 0.00390625
          %v246 = vmul.f32 %v242, 0.00390625
          %v247 = vld [vmem:[%s1] sm:$0xff]
          %v248 = vld [vmem:[%s1 + $0x8] sm:$0xff]
          %v249 = vld [vmem:[%s1 + $0x10] sm:$0xff]
          %v250 = vld [vmem:[%s1 + $0x18] sm:$0xff]
          %v255 = vlaneseq
          %v256 = vand.u32 %v255, 127
          %v257 = vlaneseq
          %v258 = vshrl.u32 %v257, 7
          %v259 = vsub.s32 %v256, %v258
          %v260 = vrot.slane %v243, %v259
          %v261 = vadd.s32 %v256, 4294967288
          %v262 = vlaneseq
          %v263 = vshrl.u32 %v262, 7
          %v264 = vsub.s32 %v261, %v263
          %v265 = vrot.slane %v244, %v264
          %vm266 = vcmask 130112
          %v267 = vsel %vm266, %v265, %v260
          %v268 = vadd.s32 %v256, 4294967280
          %v269 = vlaneseq
          %v270 = vshrl.u32 %v269, 7
          %v271 = vsub.s32 %v268, %v270
          %v272 = vrot.slane %v245, %v271
          %vm273 = vcmask 195712
          %v274 = vsel %vm273, %v272, %v267
          %v275 = vadd.s32 %v256, 4294967272
          %v276 = vlaneseq
          %v277 = vshrl.u32 %v276, 7
          %v278 = vsub.s32 %v275, %v277
          %v279 = vrot.slane %v246, %v278
          %vm280 = vcmask 261312
          %v281 = vsel %vm280, %v279, %v274
          %vm282 = vcmask 261120
          %v283 = vsel %vm282, %v281, 0
          %285 = vmatprep.subr.mxu0 0.0
          %286 = vmatpush1.msra.mxu0 %v247
          %287 = vmatprep.subr.mxu0 0.0
          %288 = vmatpush1.msra.mxu0 %v248
          %289 = vmatprep.subr.mxu0 0.0
          %290 = vmatpush1.msra.mxu0 %v249
          %291 = vmatprep.subr.mxu0 0.0
          %292 = vmatpush1.msra.mxu0 %v250
          %293 = vmatprep.subr.mxu0 0.0
          %294 = vmatpush1.msra.mxu0 0.0
          %295 = vmatprep.subr.mxu0 0.0
          %296 = vmatpush1.msra.mxu0 0.0
          %297 = vmatprep.subr.mxu0 0.0
          %298 = vmatpush1.msra.mxu0 0.0
          %299 = vmatprep.subr.mxu0 0.0
          %300 = vmatpush1.msra.mxu0 0.0
          %301 = vmatprep.subr.mxu0 0.0
          %302 = vmatpush1.msra.mxu0 0.0
          %303 = vmatprep.subr.mxu0 0.0
          %304 = vmatpush1.msra.mxu0 0.0
          %305 = vmatprep.subr.mxu0 0.0
          %306 = vmatpush1.msra.mxu0 0.0
          %307 = vmatprep.subr.mxu0 0.0
          %308 = vmatpush1.msra.mxu0 0.0
          %309 = vmatprep.subr.mxu0 0.0
          %310 = vmatpush1.msra.mxu0 0.0
          %311 = vmatprep.subr.mxu0 0.0
          %312 = vmatpush1.msra.mxu0 0.0
          %313 = vmatprep.subr.mxu0 0.0
          %314 = vmatpush1.msra.mxu0 0.0
          %315 = vmatprep.subr.mxu0 0.0
          %316 = vmatpush1.msra.mxu0 0.0
          %317 = vmatprep.subr.mxu0 0.0
          %318 = vmatpush1.msra.mxu0 0.0
          %319 = vmatprep.subr.mxu0 0.0
          %320 = vmatpush1.msra.mxu0 0.0
          %321 = vmatprep.subr.mxu0 0.0
          %322 = vmatpush1.msra.mxu0 0.0
          %323 = vmatprep.subr.mxu0 0.0
          %324 = vmatpush1.msra.mxu0 0.0
          %325 = vmatprep.subr.mxu0 0.0
          %326 = vmatpush1.msra.mxu0 0.0
          %327 = vmatprep.subr.mxu0 0.0
          %328 = vmatpush1.msra.mxu0 0.0
          %329 = vmatprep.subr.mxu0 0.0
          %330 = vmatpush1.msra.mxu0 0.0
          %331 = vmatprep.subr.mxu0 0.0
          %332 = vmatpush1.msra.mxu0 0.0
          %333 = vmatprep.subr.mxu0 0.0
          %334 = vmatpush1.msra.mxu0 0.0
          %335 = vmatprep.subr.mxu0 0.0
          %336 = vmatpush1.msra.mxu0 0.0
          %337 = vmatprep.subr.mxu0 0.0
          %338 = vmatpush1.msra.mxu0 0.0
          %339 = vmatprep.subr.mxu0 0.0
          %340 = vmatpush1.msra.mxu0 0.0
          %341 = vmatprep.subr.mxu0 0.0
          %342 = vmatpush1.msra.mxu0 0.0
          %343 = vmatprep.subr.mxu0 0.0
          %344 = vmatpush1.msra.mxu0 0.0
          %345 = vmatprep.subr.mxu0 0.0
          %346 = vmatpush1.msra.mxu0 0.0
          %347 = vmatprep.subr.mxu0 0.0
          %348 = vmatpush1.msra.mxu0 0.0
          %349 = vmatprep.mubr.f32.mxu0 0.0
          %350 = vmatmul.mubr.f32.gmra.mrb[0].mxu0 %v283
          %v351 = vpop.f32.mrb[0].mxu0
          %v352 = vadd.f32 0.0, %v351
          %v353 = vpop.f32.mrb[0].mxu0
          %354 = vdwg.mxu0
          %vm355 = vcmp.ge.f32.partialorder %v352, 0.0
          %v356 = vmul.f32 %v352, 0.2
          %v357 = vsel %vm355, %v352, %v356
          %v358 = vld [vmem:[%s2] sm:$0xff]
          %v359 = vld [vmem:[%s2 + $0x8] sm:$0xff]
          %vm360 = vcmask 130048
          %v362 = vsel %vm360, %v357, 0
          %364 = vmatprep.subr.mxu0 0.0
          %365 = vmatpush1.msra.mxu0 %v358
          %366 = vmatprep.subr.mxu0 0.0
          %367 = vmatpush1.msra.mxu0 %v359
          %368 = vmatprep.subr.mxu0 0.0
          %369 = vmatpush1.msra.mxu0 0.0
          %370 = vmatprep.subr.mxu0 0.0
          %371 = vmatpush1.msra.mxu0 0.0
          %372 = vmatprep.subr.mxu0 0.0
          %373 = vmatpush1.msra.mxu0 0.0
          %374 = vmatprep.subr.mxu0 0.0
          %375 = vmatpush1.msra.mxu0 0.0
          %376 = vmatprep.subr.mxu0 0.0
          %377 = vmatpush1.msra.mxu0 0.0
          %378 = vmatprep.subr.mxu0 0.0
          %379 = vmatpush1.msra.mxu0 0.0
          %380 = vmatprep.subr.mxu0 0.0
          %381 = vmatpush1.msra.mxu0 0.0
          %382 = vmatprep.subr.mxu0 0.0
          %383 = vmatpush1.msra.mxu0 0.0
          %384 = vmatprep.subr.mxu0 0.0
          %385 = vmatpush1.msra.mxu0 0.0
          %386 = vmatprep.subr.mxu0 0.0
          %387 = vmatpush1.msra.mxu0 0.0
          %388 = vmatprep.subr.mxu0 0.0
          %389 = vmatpush1.msra.mxu0 0.0
          %390 = vmatprep.subr.mxu0 0.0
          %391 = vmatpush1.msra.mxu0 0.0
          %392 = vmatprep.subr.mxu0 0.0
          %393 = vmatpush1.msra.mxu0 0.0
          %394 = vmatprep.subr.mxu0 0.0
          %395 = vmatpush1.msra.mxu0 0.0
          %396 = vmatprep.subr.mxu0 0.0
          %397 = vmatpush1.msra.mxu0 0.0
          %398 = vmatprep.subr.mxu0 0.0
          %399 = vmatpush1.msra.mxu0 0.0
          %400 = vmatprep.subr.mxu0 0.0
          %401 = vmatpush1.msra.mxu0 0.0
          %402 = vmatprep.subr.mxu0 0.0
          %403 = vmatpush1.msra.mxu0 0.0
          %404 = vmatprep.subr.mxu0 0.0
          %405 = vmatpush1.msra.mxu0 0.0
          %406 = vmatprep.subr.mxu0 0.0
          %407 = vmatpush1.msra.mxu0 0.0
          %408 = vmatprep.subr.mxu0 0.0
          %409 = vmatpush1.msra.mxu0 0.0
          %410 = vmatprep.subr.mxu0 0.0
          %411 = vmatpush1.msra.mxu0 0.0
          %412 = vmatprep.subr.mxu0 0.0
          %413 = vmatpush1.msra.mxu0 0.0
          %414 = vmatprep.subr.mxu0 0.0
          %415 = vmatpush1.msra.mxu0 0.0
          %416 = vmatprep.subr.mxu0 0.0
          %417 = vmatpush1.msra.mxu0 0.0
          %418 = vmatprep.subr.mxu0 0.0
          %419 = vmatpush1.msra.mxu0 0.0
          %420 = vmatprep.subr.mxu0 0.0
          %421 = vmatpush1.msra.mxu0 0.0
          %422 = vmatprep.subr.mxu0 0.0
          %423 = vmatpush1.msra.mxu0 0.0
          %424 = vmatprep.subr.mxu0 0.0
          %425 = vmatpush1.msra.mxu0 0.0
          %426 = vmatprep.subr.mxu0 0.0
          %427 = vmatpush1.msra.mxu0 0.0
          %428 = vmatprep.mubr.f32.mxu0 0.0
          %429 = vmatmul.mubr.f32.gmra.mrb[0].mxu0 %v362
          %v430 = vpop.f32.mrb[0].mxu0
          %v431 = vadd.f32 0.0, %v430
          %v432 = vpop.f32.mrb[0].mxu0
          %433 = vdwg.mxu0
          %v434 = vxor.u32 %v431, 2147483648
          %v435 = vmul.f32 %v434, 1.442695
          %v436 = vpow.pop %v435
          %v437 = vadd.f32 %v436, 1.0
          %v438 = vrcp.pop %v437
          %v439 = vmul.f32 1.0, %v438
          %vm440 = vcmask 57344
          %441 = vst.msk [vmem:[%s202] sm:$0x1] %vm440, %v439
        $region44: #{tpu_custom_call.1} parent=31 // pred_fallthru
          _
        %s442 = sand.u32 %s110, 1
        %s443 = scalar_lea.sflag [#allocation5], %s442
        %s444 = sand.u32 %s110, 1
        %s445 = scalar_lea.vmem [#allocation6], %s444
        // Predicated region
        $region45: #{tpu_custom_call.1} parent=31 // pred_check
          %p446 = pneg %p120
        $region46: #{tpu_custom_call.1} parent=31 // pred_check_branch
          %448 = sbr.rel (%p446) target = $region48
        $region47: #{tpu_custom_call.1} parent=31 // pred_region
          %s450 = ssub.s32 16, 16
          %451 = vsyncadd %s443, %s450
          %s452 = smul.addr %s24, 16
          %s453 = scalar_lea.hbm %s3, %s452
          %s455 = sshll.u32 %s445, 4
          %s456 = int_to_ptr.vmem [resolvable:$true] %s455
          %458 = dma.vmem_to_hbm [thread:$0]  %s456, 16, %s453, %s443
        $region48: #{tpu_custom_call.1} parent=31 // pred_fallthru
          _
      $region32: #{tpu_custom_call.1} parent=5 // pred_fallthru
        _
      %p459 = scmp.le.s32.totalorder 2, %s15
      // Predicated region
      $region49: #{tpu_custom_call.1} parent=5 // pred_check
        %p460 = pneg %p459
      $region50: #{tpu_custom_call.1} parent=5 // pred_check_branch
        %462 = sbr.rel (%p460) target = $region52
      $region51: #{tpu_custom_call.1} parent=5 // pred_region
        %s463 = ssub.s32 %s15, 2
        // Predicated region
        $region53: #{tpu_custom_call.1} parent=51 // pred_check
          %p464 = pneg %p126
        $region54: #{tpu_custom_call.1} parent=51 // pred_check_branch
          %466 = sbr.rel (%p464) target = $region56
        $region55: #{tpu_custom_call.1} parent=51 // pred_region
          %s467 = sand.u32 %s111, 1
          %s468 = scalar_lea.sflag [#allocation5], %s467
          %s469 = sand.u32 %s111, 1
          %s470 = scalar_lea.vmem [#allocation6], %s469
          %471 = dma.done %s468, 16
        $region56: #{tpu_custom_call.1} parent=51 // pred_fallthru
          _
      $region52: #{tpu_custom_call.1} parent=5 // pred_fallthru
        _
    $region6: #{tpu_custom_call.1} parent=1 // loop_footer
      %s19 = sadd.s32 1, %s15
    $region7: #{tpu_custom_call.1} parent=1 // loop_footer_branch
      %14 = sbr.rel target = $region3
    $region8: #{tpu_custom_call.1} parent=1 // loop_exit
      _
    %472 = vsyncpa [#allocation4], 1
    %s473 = scalar_lea.sflag [#allocation4], 1
    %474 = vsyncpa %s473, 1
    %475 = vsyncpa [#allocation5], 1
    %s476 = scalar_lea.sflag [#allocation5], 1
    %477 = vsyncpa %s476, 1

</llo_original>
